<compile_context>
chip_gen: v6e
topology: v6e:2x2x1
jax: 0.10.0
libtpu: 0.0.40
codegen_flags: <defaults>
</compile_context>

<pallas_src>
import math
import numpy as np
import jax
import jax.numpy as jnp
from jax import lax
from jax.experimental import pallas as pl
from jax.experimental.pallas import tpu as pltpu


def dpa_kernel(q_in_ref, key_ref, val_ref, wqT_ref, bq_ref, wk_ref, bk_ref, o_ref):
    # q projection (attention scale already folded into wqT / bq by the wrapper)
    q = jnp.dot(q_in_ref[...], wqT_ref[...],
                preferred_element_type=jnp.float32) + bq_ref[...]            # (TB, Datt)

    # Fused k projection:  q . (key @ Wk.T + bk)  ==  (q @ Wk) . key  +  q . bk
    qk = jnp.dot(q, wk_ref[...], preferred_element_type=jnp.float32)        # (TB, Dto)
    qb = jnp.sum(q * bk_ref[...], axis=-1, keepdims=True)                   # (TB, 1)

    # dots[b, i] = sum_d key[b, i, d] * qk[b, d]  (+ constant-per-batch bias term)
    dots = jnp.sum(key_ref[...] * qk[:, None, :], axis=-1) + qb             # (TB, S)

    # softmax over slots (+ eps), f32 throughout
    m = jnp.max(dots, axis=-1, keepdims=True)
    e = jnp.exp(dots - m)
    attn = e / jnp.sum(e, axis=-1, keepdims=True) + 1e-9                    # (TB, S)

    # output[b, d] = sum_i attn[b, i] * value[b, i, d]
    out = jnp.sum(val_ref[...] * attn[:, :, None], axis=1)                  # (TB, Dv)
    o_ref[...] = out.astype(o_ref.dtype)


def dot_product_attention(key, value, query, wq, bq, wk, bk, *, batch_tile=8):
    """key: (B,S,Dto); value: (B,S,Dv); query: (B,Datt); wq: (Datt,Datt); wk: (Datt,Dto)."""
    B, S, Dto = key.shape
    Dv = value.shape[-1]
    Datt = wq.shape[0]
    scale = Datt ** (-0.5)

    TB = min(batch_tile, B)
    assert B % TB == 0, "batch must be divisible by the batch tile"
    grid = (B // TB,)

    # Wrapper-side constant folding: scale into the q projection; pre-transpose Wq.
    wqT_s = (jnp.asarray(wq).T * scale).astype(jnp.float32)                 # (Datt, Datt)
    bq_s = (jnp.asarray(bq) * scale).reshape(1, Datt).astype(jnp.float32)   # (1, Datt)
    wk_m = jnp.asarray(wk).astype(jnp.float32)                              # (Datt, Dto) used as q @ Wk
    bk_m = jnp.asarray(bk).reshape(1, Datt).astype(jnp.float32)             # (1, Datt)

    # TODO(synk): BatchLinear's hypernetwork path (per-sample `params` dict of batched
    # weights) is not exercised by this forward (params=None) and is not implemented here.

    return pl.pallas_call(
        dpa_kernel,
        out_shape=jax.ShapeDtypeStruct((B, Dv), jnp.float32),
        grid=grid,
        in_specs=[
            pl.BlockSpec((TB, Datt), lambda b: (b, 0)),        # query
            pl.BlockSpec((TB, S, Dto), lambda b: (b, 0, 0)),   # key
            pl.BlockSpec((TB, S, Dv), lambda b: (b, 0, 0)),    # value
            pl.BlockSpec((Datt, Datt), lambda b: (0, 0)),      # Wq.T * scale
            pl.BlockSpec((1, Datt), lambda b: (0, 0)),         # bq * scale
            pl.BlockSpec((Datt, Dto), lambda b: (0, 0)),       # Wk
            pl.BlockSpec((1, Datt), lambda b: (0, 0)),         # bk
        ],
        out_specs=pl.BlockSpec((TB, Dv), lambda b: (b, 0)),
        compiler_params=pltpu.CompilerParams(dimension_semantics=("parallel",)),
    )(query, key, value, wqT_s, bq_s, wk_m, bk_m)


def dot_product_attention_reference(key, value, query, wq, bq, wk, bk):
    """Pure-JAX reference matching the PyTorch forward."""
    Datt = wq.shape[0]
    scale = Datt ** (-0.5)
    hi = lax.Precision.HIGHEST
    q = jnp.matmul(query, wq.T, precision=hi) + bq                          # (B, Datt)
    k = jnp.matmul(key, wk.T, precision=hi) + bk                            # (B, S, Datt)
    dots = jnp.einsum('bd,bid->bi', q, k, precision=hi) * scale
    attn = jax.nn.softmax(dots, axis=-1) + 1e-9
    return jnp.einsum('bi,bid->bd', attn, value, precision=hi)


if __name__ == "__main__":
    B, S = 16, 8            # batch, slots
    Dto, Datt = 48, 32      # attended_to_dim, attending_dim
    Dv = 48                 # value feature dim

    rng = jax.random.PRNGKey(0)
    ks = jax.random.split(rng, 7)
    key_in = jax.random.normal(ks[0], (B, S, Dto), jnp.float32)
    value = jax.random.normal(ks[1], (B, S, Dv), jnp.float32)
    query = jax.random.normal(ks[2], (B, Datt), jnp.float32)
    # nn.Linear-style init scale (num_heads=1: a single (to_q, to_k) pair).
    wq = jax.random.normal(ks[3], (Datt, Datt), jnp.float32) / math.sqrt(Datt)
    bq = jax.random.normal(ks[4], (Datt,), jnp.float32) * 0.1
    wk = jax.random.normal(ks[5], (Datt, Dto), jnp.float32) / math.sqrt(Dto)
    bk = jax.random.normal(ks[6], (Datt,), jnp.float32) * 0.1

    out = jax.block_until_ready(dot_product_attention(key_in, value, query, wq, bq, wk, bk))
    ref = jax.block_until_ready(dot_product_attention_reference(key_in, value, query, wq, bq, wk, bk))

    assert out.shape == (B, Dv)
    np.testing.assert_allclose(np.asarray(out), np.asarray(ref), rtol=1e-3, atol=1e-3)
    print("KERNEL_OK")
</pallas_src>

<mosaic_0001>
module attributes {stable_mosaic.version = 11 : i64} {
  func.func @dpa_kernel(%arg0: i32, %arg1: memref<8x32xf32, #tpu.memory_space<vmem>>, %arg2: memref<8x8x48xf32, #tpu.memory_space<vmem>>, %arg3: memref<8x8x48xf32, #tpu.memory_space<vmem>>, %arg4: memref<32x32xf32, #tpu.memory_space<vmem>>, %arg5: memref<1x32xf32, #tpu.memory_space<vmem>>, %arg6: memref<32x48xf32, #tpu.memory_space<vmem>>, %arg7: memref<1x32xf32, #tpu.memory_space<vmem>>, %arg8: memref<8x48xf32, #tpu.memory_space<vmem>>) attributes {dimension_semantics = [#tpu.dimension_semantics<parallel>], iteration_bounds = array<i64: 2>, scalar_prefetch = 0 : i64, scratch_operands = 0 : i64, tpu.core_type = #tpu.core_type<tc>, window_params = [{transform_indices = @transform_0, window_bounds = array<i64: 8, 32>}, {transform_indices = @transform_1, window_bounds = array<i64: 8, 8, 48>}, {transform_indices = @transform_2, window_bounds = array<i64: 8, 8, 48>}, {pipeline_mode = #tpu.pipeline_mode<synchronous>, transform_indices = @transform_3, window_bounds = array<i64: 32, 32>}, {pipeline_mode = #tpu.pipeline_mode<synchronous>, transform_indices = @transform_4, window_bounds = array<i64: 1, 32>}, {pipeline_mode = #tpu.pipeline_mode<synchronous>, transform_indices = @transform_5, window_bounds = array<i64: 32, 48>}, {pipeline_mode = #tpu.pipeline_mode<synchronous>, transform_indices = @transform_6, window_bounds = array<i64: 1, 32>}, {transform_indices = @transform_7, window_bounds = array<i64: 8, 48>}]} {
    %c0 = arith.constant 0 : index
    %c0_0 = arith.constant 0 : index
    %0 = vector.load %arg1[%c0, %c0_0] : memref<8x32xf32, #tpu.memory_space<vmem>>, vector<8x32xf32>
    %c0_1 = arith.constant 0 : index
    %c0_2 = arith.constant 0 : index
    %1 = vector.load %arg4[%c0_1, %c0_2] : memref<32x32xf32, #tpu.memory_space<vmem>>, vector<32x32xf32>
    %cst = arith.constant dense<0.000000e+00> : vector<8x32xf32>
    %2 = tpu.matmul %0, %1, %cst {dimension_numbers = #tpu.dot_dimension_numbers<[1], [0], [0], [1], [0, 0, 1, 1], [], []>} : vector<8x32xf32>, vector<32x32xf32>, vector<8x32xf32> -> vector<8x32xf32>
    %c0_3 = arith.constant 0 : index
    %c0_4 = arith.constant 0 : index
    %3 = vector.load %arg5[%c0_3, %c0_4] : memref<1x32xf32, #tpu.memory_space<vmem>>, vector<1x32xf32>
    %4 = vector.broadcast %3 : vector<1x32xf32> to vector<8x32xf32>
    %5 = arith.addf %2, %4 : vector<8x32xf32>
    %c0_5 = arith.constant 0 : index
    %c0_6 = arith.constant 0 : index
    %6 = vector.load %arg6[%c0_5, %c0_6] : memref<32x48xf32, #tpu.memory_space<vmem>>, vector<32x48xf32>
    %cst_7 = arith.constant dense<0.000000e+00> : vector<8x48xf32>
    %7 = tpu.matmul %5, %6, %cst_7 {dimension_numbers = #tpu.dot_dimension_numbers<[1], [0], [0], [1], [0, 0, 1, 1], [], []>} : vector<8x32xf32>, vector<32x48xf32>, vector<8x48xf32> -> vector<8x48xf32>
    %c0_8 = arith.constant 0 : index
    %c0_9 = arith.constant 0 : index
    %8 = vector.load %arg7[%c0_8, %c0_9] : memref<1x32xf32, #tpu.memory_space<vmem>>, vector<1x32xf32>
    %9 = vector.broadcast %8 : vector<1x32xf32> to vector<8x32xf32>
    %10 = arith.mulf %5, %9 : vector<8x32xf32>
    %cst_10 = arith.constant dense<0.000000e+00> : vector<8xf32>
    %11 = vector.multi_reduction <add>, %10, %cst_10 [1] : vector<8x32xf32> to vector<8xf32>
    %12 = vector.shape_cast %11 : vector<8xf32> to vector<8x1xf32>
    %c0_11 = arith.constant 0 : index
    %c0_12 = arith.constant 0 : index
    %c0_13 = arith.constant 0 : index
    %13 = vector.load %arg2[%c0_11, %c0_12, %c0_13] : memref<8x8x48xf32, #tpu.memory_space<vmem>>, vector<8x8x48xf32>
    %14 = vector.shape_cast %7 : vector<8x48xf32> to vector<8x1x48xf32>
    %15 = vector.broadcast %14 : vector<8x1x48xf32> to vector<8x8x48xf32>
    %16 = arith.mulf %13, %15 : vector<8x8x48xf32>
    %cst_14 = arith.constant dense<0.000000e+00> : vector<8x8xf32>
    %17 = vector.multi_reduction <add>, %16, %cst_14 [2] : vector<8x8x48xf32> to vector<8x8xf32>
    %18 = vector.broadcast %12 : vector<8x1xf32> to vector<8x8xf32>
    %19 = arith.addf %17, %18 : vector<8x8xf32>
    %cst_15 = arith.constant dense<0xFF800000> : vector<8xf32>
    %20 = vector.multi_reduction <maximumf>, %19, %cst_15 [1] : vector<8x8xf32> to vector<8xf32>
    %21 = vector.shape_cast %20 : vector<8xf32> to vector<8x1xf32>
    %22 = vector.broadcast %21 : vector<8x1xf32> to vector<8x8xf32>
    %23 = arith.subf %19, %22 : vector<8x8xf32>
    %24 = math.exp %23 : vector<8x8xf32>
    %cst_16 = arith.constant dense<0.000000e+00> : vector<8xf32>
    %25 = vector.multi_reduction <add>, %24, %cst_16 [1] : vector<8x8xf32> to vector<8xf32>
    %26 = vector.shape_cast %25 : vector<8xf32> to vector<8x1xf32>
    %27 = vector.broadcast %26 : vector<8x1xf32> to vector<8x8xf32>
    %28 = arith.divf %24, %27 : vector<8x8xf32>
    %cst_17 = arith.constant 9.99999971E-10 : f32
    %29 = vector.broadcast %cst_17 : f32 to vector<8x8xf32>
    %30 = arith.addf %28, %29 : vector<8x8xf32>
    %c0_18 = arith.constant 0 : index
    %c0_19 = arith.constant 0 : index
    %c0_20 = arith.constant 0 : index
    %31 = vector.load %arg3[%c0_18, %c0_19, %c0_20] : memref<8x8x48xf32, #tpu.memory_space<vmem>>, vector<8x8x48xf32>
    %32 = vector.shape_cast %30 : vector<8x8xf32> to vector<8x8x1xf32>
    %33 = vector.broadcast %32 : vector<8x8x1xf32> to vector<8x8x48xf32>
    %34 = arith.mulf %31, %33 : vector<8x8x48xf32>
    %cst_21 = arith.constant dense<0.000000e+00> : vector<8x48xf32>
    %35 = vector.multi_reduction <add>, %34, %cst_21 [1] : vector<8x8x48xf32> to vector<8x48xf32>
    %c0_22 = arith.constant 0 : index
    %c0_23 = arith.constant 0 : index
    %36 = vector.load %arg8[%c0_22, %c0_23] : memref<8x48xf32, #tpu.memory_space<vmem>>, vector<8x48xf32>
    tpu.vector_store %arg8[%c0_22, %c0_23], %35 {strides = array<i32>} : memref<8x48xf32, #tpu.memory_space<vmem>>, vector<8x48xf32>,
    return
  }
  func.func @transform_0(%arg0: i32) -> (i32, i32) {
    %c0_i32 = arith.constant 0 : i32
    %c0_i32_0 = arith.constant 0 : i32
    return %arg0, %c0_i32 : i32, i32
  }
  func.func @transform_1(%arg0: i32) -> (i32, i32, i32) {
    %c0_i32 = arith.constant 0 : i32
    %c0_i32_0 = arith.constant 0 : i32
    %c0_i32_1 = arith.constant 0 : i32
    return %arg0, %c0_i32, %c0_i32_0 : i32, i32, i32
  }
  func.func @transform_2(%arg0: i32) -> (i32, i32, i32) {
    %c0_i32 = arith.constant 0 : i32
    %c0_i32_0 = arith.constant 0 : i32
    %c0_i32_1 = arith.constant 0 : i32
    return %arg0, %c0_i32, %c0_i32_0 : i32, i32, i32
  }
  func.func @transform_3(%arg0: i32) -> (i32, i32) {
    %c0_i32 = arith.constant 0 : i32
    %c0_i32_0 = arith.constant 0 : i32
    %c0_i32_1 = arith.constant 0 : i32
    return %c0_i32, %c0_i32_0 : i32, i32
  }
  func.func @transform_4(%arg0: i32) -> (i32, i32) {
    %c0_i32 = arith.constant 0 : i32
    %c0_i32_0 = arith.constant 0 : i32
    %c0_i32_1 = arith.constant 0 : i32
    return %c0_i32, %c0_i32_0 : i32, i32
  }
  func.func @transform_5(%arg0: i32) -> (i32, i32) {
    %c0_i32 = arith.constant 0 : i32
    %c0_i32_0 = arith.constant 0 : i32
    %c0_i32_1 = arith.constant 0 : i32
    return %c0_i32, %c0_i32_0 : i32, i32
  }
  func.func @transform_6(%arg0: i32) -> (i32, i32) {
    %c0_i32 = arith.constant 0 : i32
    %c0_i32_0 = arith.constant 0 : i32
    %c0_i32_1 = arith.constant 0 : i32
    return %c0_i32, %c0_i32_0 : i32, i32
  }
  func.func @transform_7(%arg0: i32) -> (i32, i32) {
    %c0_i32 = arith.constant 0 : i32
    %c0_i32_0 = arith.constant 0 : i32
    return %arg0, %c0_i32 : i32, i32
  }
}

</mosaic_0001>

<llo_original>
// kernel: tpu_custom_call.1
$region0: #{tpu_custom_call.1}
  #allocation0 [shape = 'u32[]', space=smem, size = 0x4, offset = 0x4, fixed_abs, tag = 'smem constant byte address 0x4 - core index']
  #allocation1 [shape = 'u32[144,128]{1,0:T(1,128)}', space=vmem, size = 0x12000, scoped, tag = 'internal scratch']
  %s0 = inlined_call_operand.hbm [shape: f32[16,32], index: 0, kind: input, shape index: {}]
  %s1 = inlined_call_operand.hbm [shape: f32[16,8,48], index: 1, kind: input, shape index: {}]
  %s2 = inlined_call_operand.hbm [shape: f32[16,8,48], index: 2, kind: input, shape index: {}]
  %s3 = inlined_call_operand.hbm [shape: f32[32,32], index: 3, kind: input, shape index: {}]
  %s4 = inlined_call_operand.vmem [shape: f32[1,32], index: 4, kind: input, shape index: {}]
  %s5 = inlined_call_operand.hbm [shape: f32[32,48], index: 5, kind: input, shape index: {}]
  %s6 = inlined_call_operand.vmem [shape: f32[1,32], index: 6, kind: input, shape index: {}]
  %s7 = inlined_call_operand.hbm [shape: f32[16,48], index: 7, kind: output, shape index: {}]
  %s8 = sld [smem:[#allocation0]]
  $region81: #{tpu_custom_call.1} parent=0
    _
  %s10 = ssub.s32 1, %s8
  %s11 = scalar_select 0, %s10, %s8
  $region1: #{tpu_custom_call.1} parent=0
    #allocation2 [shape = 'u8[8192]{0}', space=vmem, size = 0x2000, scoped, tag = 'input window, operand 0']
    #allocation3 [shape = 's32[2]{0}', space=sflag, size = 0x8, scoped, tag = 'scoped memory for tpu_custom_call.1']
    #allocation4 [shape = 's32[2]{0}', space=sflag, size = 0x8, scoped, tag = 'scoped memory for tpu_custom_call.1']
    #allocation5 [shape = 'u8[65536]{0}', space=vmem, size = 0x10000, scoped, tag = 'input window, operand 1']
    #allocation6 [shape = 's32[2]{0}', space=sflag, size = 0x8, scoped, tag = 'scoped memory for tpu_custom_call.1']
    #allocation7 [shape = 'u8[65536]{0}', space=vmem, size = 0x10000, scoped, tag = 'input window, operand 2']
    #allocation8 [shape = 'u8[16384]{0}', space=vmem, size = 0x4000, scoped, tag = 'input window, operand 3, single buffered']
    #allocation9 [shape = 's32[1]{0}', space=sflag, size = 0x4, scoped, tag = 'scoped memory for tpu_custom_call.1']
    #allocation10 [shape = 'u8[16384]{0}', space=vmem, size = 0x4000, scoped, tag = 'input window, operand 5, single buffered']
    #allocation11 [shape = 'u8[8192]{0}', space=vmem, size = 0x2000, scoped, tag = 'output window, operand 0']
    %12 = vsyncpa [#allocation3], 0
    %s13 = scalar_lea.sflag [#allocation3], 1
    %14 = vsyncpa %s13, 0
    %15 = vsyncpa [#allocation6], 0
    %s16 = scalar_lea.sflag [#allocation6], 1
    %17 = vsyncpa %s16, 0
    %18 = vsyncpa [#allocation9], 0
    %19 = vsyncpa [#allocation4], 0
    %s20 = scalar_lea.sflag [#allocation4], 1
    %21 = vsyncpa %s20, 0
    loop: start=0, step=1, limit=4
    $region2: #{tpu_custom_call.1} parent=1 // loop_pre_header
      _
    $region3: #{tpu_custom_call.1} parent=1 // loop_header
      %s23 = sphi 0, %s27
      %p24 = scmp.ge.s32.totalorder %s23, 4
      %s33 = sphi 0, %s35
      %s36 = sphi 0, %s33
      %s37 = sphi 0, %s36
      %s53 = sphi 0, %s37
      %s59 = sphi 0, %s61
      %s62 = sphi 0, %s59
      %s63 = sphi 0, %s62
      %s79 = sphi 0, %s63
      %s85 = sphi 0, %s87
      %s88 = sphi 0, %s85
      %s89 = sphi 0, %s88
      %s105 = sphi 0, %s89
      %s109 = sphi 0, %s109
      %s111 = sphi 0, %s109
      %s112 = sphi 0, %s111
      %s126 = sphi 0, %s112
      %s130 = sphi 0, %s130
      %s132 = sphi 0, %s130
      %s133 = sphi 0, %s132
      %s147 = sphi 0, %s133
      %s151 = sphi 0, %s151
      %s153 = sphi 0, %s151
      %s154 = sphi 0, %s153
      %s168 = sphi 0, %s154
      %s172 = sphi 0, %s172
      %s174 = sphi 0, %s172
      %s175 = sphi 0, %s174
      %s189 = sphi 0, %s175
      %s195 = sphi 0, %s197
      %s198 = sphi 0, %s195
      %s199 = sphi 0, %s198
      %s215 = sphi 0, %s199
    $region4: #{tpu_custom_call.1} parent=1 // loop_header_branch
      %26 = sbr.rel (%p24) target = $region8
    $region5: #{tpu_custom_call.1} parent=1 // loop_body
      %s28 = ssub.s32 %s23, 1
      %s29 = ssub.s32 %s23, 2
      %s30 = sadd.s32 %s23, 1
      %s31 = ssub.s32 %s23, %s30
      %p32 = scmp.eq.s32.totalorder %s31, 0
      %s34 = sadd.s32 %s33, 1
      %s35 = scalar_select %p32, %s33, %s34
      %p38 = pneg %p32
      %p39 = scmp.eq.s32.totalorder %s23, 1
      %p40 = por %p38, %p39
      %p41 = scmp.ne.s32.totalorder %s33, %s36
      %p42 = scmp.eq.s32.totalorder %s23, 0
      %p43 = por %p41, %p42
      %p44 = scmp.ne.s32.totalorder %s33, %s36
      %p45 = scmp.eq.s32.totalorder %s28, 1
      %p46 = por %p44, %p45
      %p47 = scmp.ne.s32.totalorder %s36, %s37
      %p48 = scmp.eq.s32.totalorder %s28, 0
      %p49 = por %p47, %p48
      %p50 = scmp.ne.s32.totalorder %s36, %s37
      %p51 = scmp.eq.s32.totalorder %s29, 1
      %p52 = por %p50, %p51
      %p54 = scmp.ne.s32.totalorder %s37, %s53
      %p55 = scmp.eq.s32.totalorder %s29, 0
      %p56 = por %p54, %p55
      %s57 = ssub.s32 %s23, %s30
      %p58 = scmp.eq.s32.totalorder %s57, 0
      %s60 = sadd.s32 %s59, 1
      %s61 = scalar_select %p58, %s59, %s60
      %p64 = pneg %p58
      %p65 = scmp.eq.s32.totalorder %s23, 1
      %p66 = por %p64, %p65
      %p67 = scmp.ne.s32.totalorder %s59, %s62
      %p68 = scmp.eq.s32.totalorder %s23, 0
      %p69 = por %p67, %p68
      %p70 = scmp.ne.s32.totalorder %s59, %s62
      %p71 = scmp.eq.s32.totalorder %s28, 1
      %p72 = por %p70, %p71
      %p73 = scmp.ne.s32.totalorder %s62, %s63
      %p74 = scmp.eq.s32.totalorder %s28, 0
      %p75 = por %p73, %p74
      %p76 = scmp.ne.s32.totalorder %s62, %s63
      %p77 = scmp.eq.s32.totalorder %s29, 1
      %p78 = por %p76, %p77
      %p80 = scmp.ne.s32.totalorder %s63, %s79
      %p81 = scmp.eq.s32.totalorder %s29, 0
      %p82 = por %p80, %p81
      %s83 = ssub.s32 %s23, %s30
      %p84 = scmp.eq.s32.totalorder %s83, 0
      %s86 = sadd.s32 %s85, 1
      %s87 = scalar_select %p84, %s85, %s86
      %p90 = pneg %p84
      %p91 = scmp.eq.s32.totalorder %s23, 1
      %p92 = por %p90, %p91
      %p93 = scmp.ne.s32.totalorder %s85, %s88
      %p94 = scmp.eq.s32.totalorder %s23, 0
      %p95 = por %p93, %p94
      %p96 = scmp.ne.s32.totalorder %s85, %s88
      %p97 = scmp.eq.s32.totalorder %s28, 1
      %p98 = por %p96, %p97
      %p99 = scmp.ne.s32.totalorder %s88, %s89
      %p100 = scmp.eq.s32.totalorder %s28, 0
      %p101 = por %p99, %p100
      %p102 = scmp.ne.s32.totalorder %s88, %s89
      %p103 = scmp.eq.s32.totalorder %s29, 1
      %p104 = por %p102, %p103
      %p106 = scmp.ne.s32.totalorder %s89, %s105
      %p107 = scmp.eq.s32.totalorder %s29, 0
      %p108 = por %p106, %p107
      %s110 = sadd.s32 %s109, 1
      %p113 = scmp.eq.s32.totalorder %s23, 1
      %p114 = scmp.ne.s32.totalorder %s109, %s111
      %p115 = scmp.eq.s32.totalorder %s23, 0
      %p116 = por %p114, %p115
      %p117 = scmp.ne.s32.totalorder %s109, %s111
      %p118 = scmp.eq.s32.totalorder %s28, 1
      %p119 = por %p117, %p118
      %p120 = scmp.ne.s32.totalorder %s111, %s112
      %p121 = scmp.eq.s32.totalorder %s28, 0
      %p122 = por %p120, %p121
      %p123 = scmp.ne.s32.totalorder %s111, %s112
      %p124 = scmp.eq.s32.totalorder %s29, 1
      %p125 = por %p123, %p124
      %p127 = scmp.ne.s32.totalorder %s112, %s126
      %p128 = scmp.eq.s32.totalorder %s29, 0
      %p129 = por %p127, %p128
      %s131 = sadd.s32 %s130, 1
      %p134 = scmp.eq.s32.totalorder %s23, 1
      %p135 = scmp.ne.s32.totalorder %s130, %s132
      %p136 = scmp.eq.s32.totalorder %s23, 0
      %p137 = por %p135, %p136
      %p138 = scmp.ne.s32.totalorder %s130, %s132
      %p139 = scmp.eq.s32.totalorder %s28, 1
      %p140 = por %p138, %p139
      %p141 = scmp.ne.s32.totalorder %s132, %s133
      %p142 = scmp.eq.s32.totalorder %s28, 0
      %p143 = por %p141, %p142
      %p144 = scmp.ne.s32.totalorder %s132, %s133
      %p145 = scmp.eq.s32.totalorder %s29, 1
      %p146 = por %p144, %p145
      %p148 = scmp.ne.s32.totalorder %s133, %s147
      %p149 = scmp.eq.s32.totalorder %s29, 0
      %p150 = por %p148, %p149
      %s152 = sadd.s32 %s151, 1
      %p155 = scmp.eq.s32.totalorder %s23, 1
      %p156 = scmp.ne.s32.totalorder %s151, %s153
      %p157 = scmp.eq.s32.totalorder %s23, 0
      %p158 = por %p156, %p157
      %p159 = scmp.ne.s32.totalorder %s151, %s153
      %p160 = scmp.eq.s32.totalorder %s28, 1
      %p161 = por %p159, %p160
      %p162 = scmp.ne.s32.totalorder %s153, %s154
      %p163 = scmp.eq.s32.totalorder %s28, 0
      %p164 = por %p162, %p163
      %p165 = scmp.ne.s32.totalorder %s153, %s154
      %p166 = scmp.eq.s32.totalorder %s29, 1
      %p167 = por %p165, %p166
      %p169 = scmp.ne.s32.totalorder %s154, %s168
      %p170 = scmp.eq.s32.totalorder %s29, 0
      %p171 = por %p169, %p170
      %s173 = sadd.s32 %s172, 1
      %p176 = scmp.eq.s32.totalorder %s23, 1
      %p177 = scmp.ne.s32.totalorder %s172, %s174
      %p178 = scmp.eq.s32.totalorder %s23, 0
      %p179 = por %p177, %p178
      %p180 = scmp.ne.s32.totalorder %s172, %s174
      %p181 = scmp.eq.s32.totalorder %s28, 1
      %p182 = por %p180, %p181
      %p183 = scmp.ne.s32.totalorder %s174, %s175
      %p184 = scmp.eq.s32.totalorder %s28, 0
      %p185 = por %p183, %p184
      %p186 = scmp.ne.s32.totalorder %s174, %s175
      %p187 = scmp.eq.s32.totalorder %s29, 1
      %p188 = por %p186, %p187
      %p190 = scmp.ne.s32.totalorder %s175, %s189
      %p191 = scmp.eq.s32.totalorder %s29, 0
      %p192 = por %p190, %p191
      %s193 = ssub.s32 %s23, %s30
      %p194 = scmp.eq.s32.totalorder %s193, 0
      %s196 = sadd.s32 %s195, 1
      %s197 = scalar_select %p194, %s195, %s196
      %p200 = pneg %p194
      %p201 = scmp.eq.s32.totalorder %s23, 1
      %p202 = por %p200, %p201
      %p203 = scmp.ne.s32.totalorder %s195, %s198
      %p204 = scmp.eq.s32.totalorder %s23, 0
      %p205 = por %p203, %p204
      %p206 = scmp.ne.s32.totalorder %s195, %s198
      %p207 = scmp.eq.s32.totalorder %s28, 1
      %p208 = por %p206, %p207
      %p209 = scmp.ne.s32.totalorder %s198, %s199
      %p210 = scmp.eq.s32.totalorder %s28, 0
      %p211 = por %p209, %p210
      %p212 = scmp.ne.s32.totalorder %s198, %s199
      %p213 = scmp.eq.s32.totalorder %s29, 1
      %p214 = por %p212, %p213
      %p216 = scmp.ne.s32.totalorder %s199, %s215
      %p217 = scmp.eq.s32.totalorder %s29, 0
      %p218 = por %p216, %p217
      %p219 = scmp.le.s32.totalorder 1, %s23
      %p220 = scmp.lt.s32.totalorder %s23, 3
      %p221 = pnand %p219, %p220
      %p222 = pneg %p221
      // Predicated region
      $region9: #{tpu_custom_call.1} parent=5 // pred_check
        _
      $region10: #{tpu_custom_call.1} parent=5 // pred_check_branch
        %224 = sbr.rel (%p221) target = $region12
      $region11: #{tpu_custom_call.1} parent=5 // pred_region
        %s225 = ssub.s32 %s23, 1
        // Predicated region
        $region13: #{tpu_custom_call.1} parent=11 // pred_check
          %p226 = pneg %p122
        $region14: #{tpu_custom_call.1} parent=11 // pred_check_branch
          %228 = sbr.rel (%p226) target = $region16
        $region15: #{tpu_custom_call.1} parent=11 // pred_region
          %s230 = ssub.s32 512, 512
          %231 = vsyncadd [#allocation9], %s230
          %s232 = sshll.u32 [#allocation8], 4
          %s233 = int_to_ptr.vmem [resolvable:$true] %s232
          %238 = dma.hbm_to_vmem [thread:$0]  %s3, 512, %s233, [#allocation9], 128, 128, 8
        $region16: #{tpu_custom_call.1} parent=11 // pred_fallthru
          _
        // Predicated region
        $region17: #{tpu_custom_call.1} parent=11 // pred_check
          %p239 = pneg %p143
        $region18: #{tpu_custom_call.1} parent=11 // pred_check_branch
          %241 = sbr.rel (%p239) target = $region20
        $region19: #{tpu_custom_call.1} parent=11 // pred_region
          _
        $region20: #{tpu_custom_call.1} parent=11 // pred_fallthru
          _
        // Predicated region
        $region21: #{tpu_custom_call.1} parent=11 // pred_check
          %p242 = pneg %p164
        $region22: #{tpu_custom_call.1} parent=11 // pred_check_branch
          %244 = sbr.rel (%p242) target = $region24
        $region23: #{tpu_custom_call.1} parent=11 // pred_region
          %s246 = ssub.s32 512, 512
          %247 = vsyncadd [#allocation9], %s246
          %s248 = sshll.u32 [#allocation10], 4
          %s249 = int_to_ptr.vmem [resolvable:$true] %s248
          %254 = dma.hbm_to_vmem [thread:$0]  %s5, 512, %s249, [#allocation9], 128, 128, 8
        $region24: #{tpu_custom_call.1} parent=11 // pred_fallthru
          _
        // Predicated region
        $region25: #{tpu_custom_call.1} parent=11 // pred_check
          %p255 = pneg %p185
        $region26: #{tpu_custom_call.1} parent=11 // pred_check_branch
          %257 = sbr.rel (%p255) target = $region28
        $region27: #{tpu_custom_call.1} parent=11 // pred_region
          _
        $region28: #{tpu_custom_call.1} parent=11 // pred_fallthru
          _
      $region12: #{tpu_custom_call.1} parent=5 // pred_fallthru
        _
      %p258 = scmp.lt.s32.totalorder %s23, 2
      // Predicated region
      $region29: #{tpu_custom_call.1} parent=5 // pred_check
        %p259 = pneg %p258
      $region30: #{tpu_custom_call.1} parent=5 // pred_check_branch
        %261 = sbr.rel (%p259) target = $region32
      $region31: #{tpu_custom_call.1} parent=5 // pred_region
        // Predicated region
        $region33: #{tpu_custom_call.1} parent=31 // pred_check
          %p262 = pneg %p43
        $region34: #{tpu_custom_call.1} parent=31 // pred_check_branch
          %264 = sbr.rel (%p262) target = $region36
        $region35: #{tpu_custom_call.1} parent=31 // pred_region
          %s265 = sand.u32 %s33, 1
          %s266 = scalar_lea.sflag [#allocation3], %s265
          %s267 = sand.u32 %s33, 1
          %s268 = smul.addr %s267, 8
          %s269 = scalar_lea.vmem [#allocation2], %s268
          %s271 = ssub.s32 128, 128
          %272 = vsyncadd %s266, %s271
          %s273 = smul.addr %s23, 128
          %s274 = scalar_lea.hbm %s0, %s273
          %s276 = sshll.u32 %s269, 4
          %s277 = int_to_ptr.vmem [resolvable:$true] %s276
          %279 = dma.hbm_to_vmem [thread:$0]  %s274, 128, %s277, %s266
        $region36: #{tpu_custom_call.1} parent=31 // pred_fallthru
          _
        // Predicated region
        $region37: #{tpu_custom_call.1} parent=31 // pred_check
          %p280 = pneg %p69
        $region38: #{tpu_custom_call.1} parent=31 // pred_check_branch
          %282 = sbr.rel (%p280) target = $region40
        $region39: #{tpu_custom_call.1} parent=31 // pred_region
          %s283 = sand.u32 %s23, 1
          %s284 = scalar_lea.sflag [#allocation6], %s283
          %s285 = sand.u32 %s59, 1
          %s286 = smul.addr %s285, 64
          %s287 = scalar_lea.vmem [#allocation5], %s286
          %s288 = smul.u32 8, %s23
          %s290 = ssub.s32 1024, 1024
          %291 = vsyncadd %s284, %s290
          %s292 = smul.addr %s288, 128
          %s293 = scalar_lea.hbm %s1, %s292
          %s294 = sshll.u32 %s287, 4
          %s295 = int_to_ptr.vmem [resolvable:$true] %s294
          %300 = dma.hbm_to_vmem [thread:$0]  %s293, 1024, %s295, %s284, 128, 128, 8
        $region40: #{tpu_custom_call.1} parent=31 // pred_fallthru
          _
        // Predicated region
        $region41: #{tpu_custom_call.1} parent=31 // pred_check
          %p301 = pneg %p95
        $region42: #{tpu_custom_call.1} parent=31 // pred_check_branch
          %303 = sbr.rel (%p301) target = $region44
        $region43: #{tpu_custom_call.1} parent=31 // pred_region
          %s304 = sand.u32 %s23, 1
          %s305 = scalar_lea.sflag [#allocation6], %s304
          %s306 = sand.u32 %s85, 1
          %s307 = smul.addr %s306, 64
          %s308 = scalar_lea.vmem [#allocation7], %s307
          %s309 = smul.u32 8, %s23
          %s311 = ssub.s32 1024, 1024
          %312 = vsyncadd %s305, %s311
          %s313 = smul.addr %s309, 128
          %s314 = scalar_lea.hbm %s2, %s313
          %s315 = sshll.u32 %s308, 4
          %s316 = int_to_ptr.vmem [resolvable:$true] %s315
          %321 = dma.hbm_to_vmem [thread:$0]  %s314, 1024, %s316, %s305, 128, 128, 8
        $region44: #{tpu_custom_call.1} parent=31 // pred_fallthru
          _
      $region32: #{tpu_custom_call.1} parent=5 // pred_fallthru
        _
      %p322 = scmp.le.s32.totalorder 1, %s23
      %p323 = scmp.lt.s32.totalorder %s23, 3
      %p324 = pnand %p322, %p323
      %p325 = pneg %p324
      // Predicated region
      $region45: #{tpu_custom_call.1} parent=5 // pred_check
        _
      $region46: #{tpu_custom_call.1} parent=5 // pred_check_branch
        %327 = sbr.rel (%p324) target = $region48
      $region47: #{tpu_custom_call.1} parent=5 // pred_region
        %s328 = ssub.s32 %s23, 1
        %s329 = sand.u32 %s36, 1
        %s330 = scalar_lea.sflag [#allocation3], %s329
        %s331 = sand.u32 %s36, 1
        %s332 = smul.addr %s331, 8
        %s333 = scalar_lea.vmem [#allocation2], %s332
        // Predicated region
        $region49: #{tpu_custom_call.1} parent=47 // pred_check
          %p334 = pneg %p49
        $region50: #{tpu_custom_call.1} parent=47 // pred_check_branch
          %336 = sbr.rel (%p334) target = $region52
        $region51: #{tpu_custom_call.1} parent=47 // pred_region
          %337 = dma.done %s330, 128
        $region52: #{tpu_custom_call.1} parent=47 // pred_fallthru
          _
        %s338 = sand.u32 %s28, 1
        %s339 = scalar_lea.sflag [#allocation6], %s338
        %s340 = sand.u32 %s62, 1
        %s341 = smul.addr %s340, 64
        %s342 = scalar_lea.vmem [#allocation5], %s341
        // Predicated region
        $region53: #{tpu_custom_call.1} parent=47 // pred_check
          %p343 = pneg %p75
        $region54: #{tpu_custom_call.1} parent=47 // pred_check_branch
          %345 = sbr.rel (%p343) target = $region56
        $region55: #{tpu_custom_call.1} parent=47 // pred_region
          %346 = dma.done %s339, 1024
        $region56: #{tpu_custom_call.1} parent=47 // pred_fallthru
          _
        %s347 = sand.u32 %s28, 1
        %s348 = scalar_lea.sflag [#allocation6], %s347
        %s349 = sand.u32 %s88, 1
        %s350 = smul.addr %s349, 64
        %s351 = scalar_lea.vmem [#allocation7], %s350
        // Predicated region
        $region57: #{tpu_custom_call.1} parent=47 // pred_check
          %p352 = pneg %p101
        $region58: #{tpu_custom_call.1} parent=47 // pred_check_branch
          %354 = sbr.rel (%p352) target = $region60
        $region59: #{tpu_custom_call.1} parent=47 // pred_region
          %355 = dma.done %s348, 1024
        $region60: #{tpu_custom_call.1} parent=47 // pred_fallthru
          _
        // Predicated region
        $region61: #{tpu_custom_call.1} parent=47 // pred_check
          %p356 = pneg %p122
        $region62: #{tpu_custom_call.1} parent=47 // pred_check_branch
          %358 = sbr.rel (%p356) target = $region64
        $region63: #{tpu_custom_call.1} parent=47 // pred_region
          %359 = dma.done [#allocation9], 512
        $region64: #{tpu_custom_call.1} parent=47 // pred_fallthru
          _
        // Predicated region
        $region65: #{tpu_custom_call.1} parent=47 // pred_check
          %p360 = pneg %p164
        $region66: #{tpu_custom_call.1} parent=47 // pred_check_branch
          %362 = sbr.rel (%p360) target = $region68
        $region67: #{tpu_custom_call.1} parent=47 // pred_region
          %363 = dma.done [#allocation9], 512
        $region68: #{tpu_custom_call.1} parent=47 // pred_fallthru
          _
        %s364 = sand.u32 %s36, 1
        %s365 = scalar_lea.sflag [#allocation3], %s364
        %s366 = sand.u32 %s36, 1
        %s367 = smul.addr %s366, 8
        %s368 = scalar_lea.vmem [#allocation2], %s367
        %p369 = pneg %p49
        %p370 = pneg %p46
        %s371 = sand.u32 %s28, 1
        %s372 = scalar_lea.sflag [#allocation6], %s371
        %s373 = sand.u32 %s62, 1
        %s374 = smul.addr %s373, 64
        %s375 = scalar_lea.vmem [#allocation5], %s374
        %p376 = pneg %p75
        %p377 = pneg %p72
        %s378 = sand.u32 %s28, 1
        %s379 = scalar_lea.sflag [#allocation6], %s378
        %s380 = sand.u32 %s88, 1
        %s381 = smul.addr %s380, 64
        %s382 = scalar_lea.vmem [#allocation7], %s381
        %p383 = pneg %p101
        %p384 = pneg %p98
        %p385 = pneg %p122
        %p386 = pneg %p119
        %p387 = pneg %p143
        %p388 = pneg %p140
        %p389 = pneg %p164
        %p390 = pneg %p161
        %p391 = pneg %p185
        %p392 = pneg %p182
        %p393 = pneg %p211
        %p394 = pneg %p208
        %s395 = sand.u32 %s198, 1
        %s396 = scalar_lea.sflag [#allocation4], %s395
        %s397 = sand.u32 %s198, 1
        %s398 = smul.addr %s397, 8
        %s399 = scalar_lea.vmem [#allocation11], %s398
        %s400 = smul.u32 8, %s28
        %s401 = smul.u32 8, %s28
        %v402 = vld [vmem:[%s333] sm:$0xff]
        %v403 = vld [vmem:[#allocation8] sm:$0xff]
        %v404 = vld [vmem:[#allocation8 + $0x8] sm:$0xff]
        %v405 = vld [vmem:[#allocation8 + $0x10] sm:$0xff]
        %v406 = vld [vmem:[#allocation8 + $0x18] sm:$0xff]
        %v407 = vld [vmem:[%s4] sm:$0x1]
        %v409 = vlaneseq
        %v410 = vshrl.u32 %v409, 7
        %v411 = vsub.s32 0, %v410
        %v412 = vrot.slane %v407, %v411
        %vm414 = vcmask 261120
        %v416 = vsel %vm414, %v402, 0
        %418 = vmatprep.subr.mxu0 0.0
        %419 = vmatpush1.msra.mxu0 0.0
        %420 = vmatprep.subr.mxu0 0.0
        %421 = vmatpush1.msra.mxu0 0.0
        %422 = vmatprep.subr.mxu0 0.0
        %423 = vmatpush1.msra.mxu0 0.0
        %424 = vmatprep.subr.mxu0 0.0
        %425 = vmatpush1.msra.mxu0 0.0
        %426 = vmatprep.subr.mxu0 0.0
        %427 = vmatpush1.msra.mxu0 0.0
        %428 = vmatprep.subr.mxu0 0.0
        %429 = vmatpush1.msra.mxu0 0.0
        %430 = vmatprep.subr.mxu0 0.0
        %431 = vmatpush1.msra.mxu0 0.0
        %432 = vmatprep.subr.mxu0 0.0
        %433 = vmatpush1.msra.mxu0 0.0
        %434 = vmatprep.subr.mxu0 0.0
        %435 = vmatpush1.msra.mxu0 0.0
        %436 = vmatprep.subr.mxu0 0.0
        %437 = vmatpush1.msra.mxu0 0.0
        %438 = vmatprep.subr.mxu0 0.0
        %439 = vmatpush1.msra.mxu0 0.0
        %440 = vmatprep.subr.mxu0 0.0
        %441 = vmatpush1.msra.mxu0 0.0
        %442 = vmatprep.subr.mxu0 0.0
        %443 = vmatpush1.msra.mxu0 %v406
        %444 = vmatprep.subr.mxu0 0.0
        %445 = vmatpush1.msra.mxu0 %v405
        %446 = vmatprep.subr.mxu0 0.0
        %447 = vmatpush1.msra.mxu0 %v404
        %448 = vmatprep.subr.mxu0 0.0
        %449 = vmatpush1.msra.mxu0 %v403
        %450 = vmatprep.subr.mxu0 0.0
        %451 = vmatpush2.msra.mxu0 0.0
        %452 = vmatprep.subr.mxu0 0.0
        %453 = vmatpush2.msra.mxu0 0.0
        %454 = vmatprep.subr.mxu0 0.0
        %455 = vmatpush2.msra.mxu0 0.0
        %456 = vmatprep.subr.mxu0 0.0
        %457 = vmatpush2.msra.mxu0 0.0
        %458 = vmatprep.subr.mxu0 0.0
        %459 = vmatpush2.msra.mxu0 0.0
        %460 = vmatprep.subr.mxu0 0.0
        %461 = vmatpush2.msra.mxu0 0.0
        %462 = vmatprep.subr.mxu0 0.0
        %463 = vmatpush2.msra.mxu0 0.0
        %464 = vmatprep.subr.mxu0 0.0
        %465 = vmatpush2.msra.mxu0 0.0
        %466 = vmatprep.subr.mxu0 0.0
        %467 = vmatpush2.msra.mxu0 0.0
        %468 = vmatprep.subr.mxu0 0.0
        %469 = vmatpush2.msra.mxu0 0.0
        %470 = vmatprep.subr.mxu0 0.0
        %471 = vmatpush2.msra.mxu0 0.0
        %472 = vmatprep.subr.mxu0 0.0
        %473 = vmatpush2.msra.mxu0 0.0
        %474 = vmatprep.subr.mxu0 0.0
        %475 = vmatpush2.msra.mxu0 0.0
        %476 = vmatprep.subr.mxu0 0.0
        %477 = vmatpush2.msra.mxu0 0.0
        %478 = vmatprep.subr.mxu0 0.0
        %479 = vmatpush2.msra.mxu0 0.0
        %480 = vmatprep.subr.mxu0 0.0
        %481 = vmatpush2.msra.mxu0 0.0
        %482 = vmatprep.mubr.f32.mxu0 0.0
        %483 = vmatmul.mubr.f32.gmra.mxu0 %v416
        %v484 = vpop.f32.mrf.mxu0
        %v485 = vadd.f32 %v412, %v484
        %v486 = vpop.f32.mrf.mxu0
        %487 = vdwg.mxu0
        %v488 = vld [vmem:[#allocation10] sm:$0xff]
        %v489 = vld [vmem:[#allocation10 + $0x8] sm:$0xff]
        %v490 = vld [vmem:[#allocation10 + $0x10] sm:$0xff]
        %v491 = vld [vmem:[#allocation10 + $0x18] sm:$0xff]
        %v493 = vsel %vm414, %v485, 0
        %495 = vmatprep.subr.mxu0 0.0
        %496 = vmatpush1.msra.mxu0 0.0
        %497 = vmatprep.subr.mxu0 0.0
        %498 = vmatpush1.msra.mxu0 0.0
        %499 = vmatprep.subr.mxu0 0.0
        %500 = vmatpush1.msra.mxu0 0.0
        %501 = vmatprep.subr.mxu0 0.0
        %502 = vmatpush1.msra.mxu0 0.0
        %503 = vmatprep.subr.mxu0 0.0
        %504 = vmatpush1.msra.mxu0 0.0
        %505 = vmatprep.subr.mxu0 0.0
        %506 = vmatpush1.msra.mxu0 0.0
        %507 = vmatprep.subr.mxu0 0.0
        %508 = vmatpush1.msra.mxu0 0.0
        %509 = vmatprep.subr.mxu0 0.0
        %510 = vmatpush1.msra.mxu0 0.0
        %511 = vmatprep.subr.mxu0 0.0
        %512 = vmatpush1.msra.mxu0 0.0
        %513 = vmatprep.subr.mxu0 0.0
        %514 = vmatpush1.msra.mxu0 0.0
        %515 = vmatprep.subr.mxu0 0.0
        %516 = vmatpush1.msra.mxu0 0.0
        %517 = vmatprep.subr.mxu0 0.0
        %518 = vmatpush1.msra.mxu0 0.0
        %519 = vmatprep.subr.mxu0 0.0
        %520 = vmatpush1.msra.mxu0 %v491
        %521 = vmatprep.subr.mxu0 0.0
        %522 = vmatpush1.msra.mxu0 %v490
        %523 = vmatprep.subr.mxu0 0.0
        %524 = vmatpush1.msra.mxu0 %v489
        %525 = vmatprep.subr.mxu0 0.0
        %526 = vmatpush1.msra.mxu0 %v488
        %527 = vmatprep.subr.mxu0 0.0
        %528 = vmatpush2.msra.mxu0 0.0
        %529 = vmatprep.subr.mxu0 0.0
        %530 = vmatpush2.msra.mxu0 0.0
        %531 = vmatprep.subr.mxu0 0.0
        %532 = vmatpush2.msra.mxu0 0.0
        %533 = vmatprep.subr.mxu0 0.0
        %534 = vmatpush2.msra.mxu0 0.0
        %535 = vmatprep.subr.mxu0 0.0
        %536 = vmatpush2.msra.mxu0 0.0
        %537 = vmatprep.subr.mxu0 0.0
        %538 = vmatpush2.msra.mxu0 0.0
        %539 = vmatprep.subr.mxu0 0.0
        %540 = vmatpush2.msra.mxu0 0.0
        %541 = vmatprep.subr.mxu0 0.0
        %542 = vmatpush2.msra.mxu0 0.0
        %543 = vmatprep.subr.mxu0 0.0
        %544 = vmatpush2.msra.mxu0 0.0
        %545 = vmatprep.subr.mxu0 0.0
        %546 = vmatpush2.msra.mxu0 0.0
        %547 = vmatprep.subr.mxu0 0.0
        %548 = vmatpush2.msra.mxu0 0.0
        %549 = vmatprep.subr.mxu0 0.0
        %550 = vmatpush2.msra.mxu0 0.0
        %551 = vmatprep.subr.mxu0 0.0
        %552 = vmatpush2.msra.mxu0 0.0
        %553 = vmatprep.subr.mxu0 0.0
        %554 = vmatpush2.msra.mxu0 0.0
        %555 = vmatprep.subr.mxu0 0.0
        %556 = vmatpush2.msra.mxu0 0.0
        %557 = vmatprep.subr.mxu0 0.0
        %558 = vmatpush2.msra.mxu0 0.0
        %559 = vmatprep.mubr.f32.mxu0 0.0
        %560 = vmatmul.mubr.f32.gmra.mxu0 %v493
        %v561 = vpop.f32.mrf.mxu0
        %v562 = vadd.f32 0.0, %v561
        %v563 = vpop.f32.mrf.mxu0
        %564 = vdwg.mxu0
        %v565 = vld [vmem:[%s6] sm:$0x1]
        %v567 = vlaneseq
        %v568 = vshrl.u32 %v567, 7
        %v569 = vsub.s32 0, %v568
        %v570 = vrot.slane %v565, %v569
        %v572 = vmul.f32 %v485, %v570
        %v573 = vsel %vm414, %v572, 0.0
        %574 = vadd.xlane.f32.xlu0 %v573
        %v575 = vpop.xlane.xlu0 %574
        %v576 = vld [vmem:[%s342] sm:$0xff]
        %v577 = vld [vmem:[%s342 + $0x8] sm:$0xff]
        %v578 = vld [vmem:[%s342 + $0x10] sm:$0xff]
        %v579 = vld [vmem:[%s342 + $0x18] sm:$0xff]
        %v580 = vld [vmem:[%s342 + $0x20] sm:$0xff]
        %v581 = vld [vmem:[%s342 + $0x28] sm:$0xff]
        %v582 = vld [vmem:[%s342 + $0x30] sm:$0xff]
        %v583 = vld [vmem:[%s342 + $0x38] sm:$0xff]
        %v585 = vcombine.high %v562, %v562
        %v587 = vunpack.c.l.s4 1966171168
        %v588 = vunpack.c.0.s8 %v587
        %v589 = vlaneseq
        %v590 = vshrl.u32 %v589, 7
        %v591 = vsub.s32 %v588, %v590
        %v592 = vrot.slane %v562, %v591
        %v594 = vunpack.c.l.s4 1966171168
        %v595 = vunpack.c.0.s8 %v594
        %v596 = vlaneseq
        %v597 = vshrl.u32 %v596, 7
        %v598 = vsub.s32 %v595, %v597
        %v599 = vrot.slane %v585, %v598
        %v600 = vcombine.high %v592, %v592
        %v601 = vcombine.high %v599, %v599
        %v603 = vunpack.c.l.s4 1966171168
        %v604 = vunpack.c.0.s8 %v603
        %v605 = vlaneseq
        %v606 = vshrl.u32 %v605, 7
        %v607 = vsub.s32 %v604, %v606
        %v608 = vrot.slane %v592, %v607
        %v610 = vunpack.c.l.s4 1966171168
        %v611 = vunpack.c.0.s8 %v610
        %v612 = vlaneseq
        %v613 = vshrl.u32 %v612, 7
        %v614 = vsub.s32 %v611, %v613
        %v615 = vrot.slane %v599, %v614
        %v617 = vunpack.c.l.s4 1966171168
        %v618 = vunpack.c.0.s8 %v617
        %v619 = vlaneseq
        %v620 = vshrl.u32 %v619, 7
        %v621 = vsub.s32 %v618, %v620
        %v622 = vrot.slane %v600, %v621
        %v624 = vunpack.c.l.s4 1966171168
        %v625 = vunpack.c.0.s8 %v624
        %v626 = vlaneseq
        %v627 = vshrl.u32 %v626, 7
        %v628 = vsub.s32 %v625, %v627
        %v629 = vrot.slane %v601, %v628
        %v630 = vcombine.high %v608, %v608
        %v631 = vcombine.high %v615, %v615
        %v632 = vcombine.high %v622, %v622
        %v633 = vcombine.high %v629, %v629
        %v634 = vlaneseq
        %v635 = vshrl.u32 %v634, 7
        %v636 = vsub.s32 0, %v635
        %v637 = vrot.slane %v608, %v636
        %v638 = vlaneseq
        %v639 = vshrl.u32 %v638, 7
        %v640 = vsub.s32 0, %v639
        %v641 = vrot.slane %v622, %v640
        %v642 = vlaneseq
        %v643 = vshrl.u32 %v642, 7
        %v644 = vsub.s32 0, %v643
        %v645 = vrot.slane %v630, %v644
        %v646 = vlaneseq
        %v647 = vshrl.u32 %v646, 7
        %v648 = vsub.s32 0, %v647
        %v649 = vrot.slane %v632, %v648
        %v650 = vlaneseq
        %v651 = vshrl.u32 %v650, 7
        %v652 = vsub.s32 0, %v651
        %v653 = vrot.slane %v615, %v652
        %v654 = vlaneseq
        %v655 = vshrl.u32 %v654, 7
        %v656 = vsub.s32 0, %v655
        %v657 = vrot.slane %v629, %v656
        %v658 = vlaneseq
        %v659 = vshrl.u32 %v658, 7
        %v660 = vsub.s32 0, %v659
        %v661 = vrot.slane %v631, %v660
        %v662 = vlaneseq
        %v663 = vshrl.u32 %v662, 7
        %v664 = vsub.s32 0, %v663
        %v665 = vrot.slane %v633, %v664
        %v674 = vmul.f32 %v576, %v637
        %v675 = vmul.f32 %v577, %v641
        %v676 = vmul.f32 %v578, %v645
        %v677 = vmul.f32 %v579, %v649
        %v678 = vmul.f32 %v580, %v653
        %v679 = vmul.f32 %v581, %v657
        %v680 = vmul.f32 %v582, %v661
        %v681 = vmul.f32 %v583, %v665
        %vm682 = vcmask 392192
        %v683 = vsel %vm682, %v674, 0.0
        %684 = vadd.xlane.f32.xlu0 %v683
        %v685 = vpop.xlane.xlu0 %684
        %v686 = vsel %vm682, %v675, 0.0
        %687 = vadd.xlane.f32.xlu0 %v686
        %v688 = vpop.xlane.xlu0 %687
        %v689 = vsel %vm682, %v676, 0.0
        %690 = vadd.xlane.f32.xlu0 %v689
        %v691 = vpop.xlane.xlu0 %690
        %v692 = vsel %vm682, %v677, 0.0
        %693 = vadd.xlane.f32.xlu0 %v692
        %v694 = vpop.xlane.xlu0 %693
        %v695 = vsel %vm682, %v678, 0.0
        %696 = vadd.xlane.f32.xlu0 %v695
        %v697 = vpop.xlane.xlu0 %696
        %v698 = vsel %vm682, %v679, 0.0
        %699 = vadd.xlane.f32.xlu0 %v698
        %v700 = vpop.xlane.xlu0 %699
        %v701 = vsel %vm682, %v680, 0.0
        %702 = vadd.xlane.f32.xlu0 %v701
        %v703 = vpop.xlane.xlu0 %702
        %v704 = vsel %vm682, %v681, 0.0
        %705 = vadd.xlane.f32.xlu0 %v704
        %v706 = vpop.xlane.xlu0 %705
        %v708 = vlaneseq
        %v709 = vshrl.u32 %v708, 7
        %v710 = vsub.s32 0, %v709
        %v711 = vrot.slane %v575, %v710
        %v712 = vlaneseq
        %v713 = vshrl.u32 %v712, 7
        %v714 = vsub.s32 1, %v713
        %v715 = vrot.slane %v575, %v714
        %v716 = vlaneseq
        %v717 = vshrl.u32 %v716, 7
        %v718 = vsub.s32 2, %v717
        %v719 = vrot.slane %v575, %v718
        %v720 = vlaneseq
        %v721 = vshrl.u32 %v720, 7
        %v722 = vsub.s32 3, %v721
        %v723 = vrot.slane %v575, %v722
        %v724 = vlaneseq
        %v725 = vshrl.u32 %v724, 7
        %v726 = vsub.s32 4, %v725
        %v727 = vrot.slane %v575, %v726
        %v728 = vlaneseq
        %v729 = vshrl.u32 %v728, 7
        %v730 = vsub.s32 5, %v729
        %v731 = vrot.slane %v575, %v730
        %v732 = vlaneseq
        %v733 = vshrl.u32 %v732, 7
        %v734 = vsub.s32 6, %v733
        %v735 = vrot.slane %v575, %v734
        %v736 = vlaneseq
        %v737 = vshrl.u32 %v736, 7
        %v738 = vsub.s32 7, %v737
        %v739 = vrot.slane %v575, %v738
        %v748 = vadd.f32 %v685, %v711
        %v749 = vadd.f32 %v688, %v715
        %v750 = vadd.f32 %v691, %v719
        %v751 = vadd.f32 %v694, %v723
        %v752 = vadd.f32 %v697, %v727
        %v753 = vadd.f32 %v700, %v731
        %v754 = vadd.f32 %v703, %v735
        %v755 = vadd.f32 %v706, %v739
        %764 = vset.pattern.permute.xlu0 0
        %765 = vperm.xlu0 %764, %v748
        %v766 = vpop.permute.xlu0 %765
        %767 = vset.pattern.permute.xlu0 0
        %768 = vperm.xlu0 %767, %v749
        %v769 = vpop.permute.xlu0 %768
        %770 = vset.pattern.permute.xlu0 0
        %771 = vperm.xlu0 %770, %v750
        %v772 = vpop.permute.xlu0 %771
        %773 = vset.pattern.permute.xlu0 0
        %774 = vperm.xlu0 %773, %v751
        %v775 = vpop.permute.xlu0 %774
        %776 = vset.pattern.permute.xlu0 0
        %777 = vperm.xlu0 %776, %v752
        %v778 = vpop.permute.xlu0 %777
        %779 = vset.pattern.permute.xlu0 0
        %780 = vperm.xlu0 %779, %v753
        %v781 = vpop.permute.xlu0 %780
        %782 = vset.pattern.permute.xlu0 0
        %783 = vperm.xlu0 %782, %v754
        %v784 = vpop.permute.xlu0 %783
        %785 = vset.pattern.permute.xlu0 0
        %786 = vperm.xlu0 %785, %v755
        %v787 = vpop.permute.xlu0 %786
        %v788 = vlaneseq
        %v789 = vand.u32 %v788, 127
        %v790 = vlaneseq
        %v791 = vshrl.u32 %v790, 7
        %v792 = vsub.s32 %v789, %v791
        %v793 = vrot.slane %v766, %v792
        %v794 = vlaneseq
        %v795 = vshrl.u32 %v794, 7
        %v796 = vsub.s32 %v789, %v795
        %v797 = vrot.slane %v769, %v796
        %v798 = vlaneseq
        %v799 = vshrl.u32 %v798, 7
        %v800 = vsub.s32 %v789, %v799
        %v801 = vrot.slane %v772, %v800
        %v802 = vlaneseq
        %v803 = vshrl.u32 %v802, 7
        %v804 = vsub.s32 %v789, %v803
        %v805 = vrot.slane %v775, %v804
        %v806 = vlaneseq
        %v807 = vshrl.u32 %v806, 7
        %v808 = vsub.s32 %v789, %v807
        %v809 = vrot.slane %v778, %v808
        %v810 = vlaneseq
        %v811 = vshrl.u32 %v810, 7
        %v812 = vsub.s32 %v789, %v811
        %v813 = vrot.slane %v781, %v812
        %v814 = vlaneseq
        %v815 = vshrl.u32 %v814, 7
        %v816 = vsub.s32 %v789, %v815
        %v817 = vrot.slane %v784, %v816
        %v818 = vlaneseq
        %v819 = vshrl.u32 %v818, 7
        %v820 = vsub.s32 %v789, %v819
        %v821 = vrot.slane %v787, %v820
        %vm822 = vcmask 1041409
        %v823 = vsel %vm822, %v797, %v793
        %vm824 = vcmask 1042434
        %v825 = vsel %vm824, %v801, %v823
        %vm826 = vcmask 1043459
        %v827 = vsel %vm826, %v805, %v825
        %vm828 = vcmask 1044484
        %v829 = vsel %vm828, %v809, %v827
        %vm830 = vcmask 1045509
        %v831 = vsel %vm830, %v813, %v829
        %vm832 = vcmask 1046534
        %v833 = vsel %vm832, %v817, %v831
        %vm834 = vcmask 1047559
        %v835 = vsel %vm834, %v821, %v833
        %vm837 = vcmask 64512
        %v838 = vsel %vm837, %v835, -inf
        %839 = vmax.xlane.f32.xlu0 %v838
        %v840 = vpop.xlane.xlu0 %839
        %v842 = vlaneseq
        %v843 = vshrl.u32 %v842, 7
        %v844 = vsub.s32 0, %v843
        %v845 = vrot.slane %v840, %v844
        %v846 = vlaneseq
        %v847 = vshrl.u32 %v846, 7
        %v848 = vsub.s32 1, %v847
        %v849 = vrot.slane %v840, %v848
        %v850 = vlaneseq
        %v851 = vshrl.u32 %v850, 7
        %v852 = vsub.s32 2, %v851
        %v853 = vrot.slane %v840, %v852
        %v854 = vlaneseq
        %v855 = vshrl.u32 %v854, 7
        %v856 = vsub.s32 3, %v855
        %v857 = vrot.slane %v840, %v856
        %v858 = vlaneseq
        %v859 = vshrl.u32 %v858, 7
        %v860 = vsub.s32 4, %v859
        %v861 = vrot.slane %v840, %v860
        %v862 = vlaneseq
        %v863 = vshrl.u32 %v862, 7
        %v864 = vsub.s32 5, %v863
        %v865 = vrot.slane %v840, %v864
        %v866 = vlaneseq
        %v867 = vshrl.u32 %v866, 7
        %v868 = vsub.s32 6, %v867
        %v869 = vrot.slane %v840, %v868
        %v870 = vlaneseq
        %v871 = vshrl.u32 %v870, 7
        %v872 = vsub.s32 7, %v871
        %v873 = vrot.slane %v840, %v872
        %v882 = vsub.f32 %v748, %v845
        %v883 = vsub.f32 %v749, %v849
        %v884 = vsub.f32 %v750, %v853
        %v885 = vsub.f32 %v751, %v857
        %v886 = vsub.f32 %v752, %v861
        %v887 = vsub.f32 %v753, %v865
        %v888 = vsub.f32 %v754, %v869
        %v889 = vsub.f32 %v755, %v873
        %v890 = vmul.f32 %v882, 1.442695
        %v891 = vpow.pop %v890
        %v892 = vmul.f32 %v883, 1.442695
        %v893 = vpow.pop %v892
        %v894 = vmul.f32 %v884, 1.442695
        %v895 = vpow.pop %v894
        %v896 = vmul.f32 %v885, 1.442695
        %v897 = vpow.pop %v896
        %v898 = vmul.f32 %v886, 1.442695
        %v899 = vpow.pop %v898
        %v900 = vmul.f32 %v887, 1.442695
        %v901 = vpow.pop %v900
        %v902 = vmul.f32 %v888, 1.442695
        %v903 = vpow.pop %v902
        %v904 = vmul.f32 %v889, 1.442695
        %v905 = vpow.pop %v904
        %914 = vset.pattern.permute.xlu0 0
        %915 = vperm.xlu0 %914, %v891
        %v916 = vpop.permute.xlu0 %915
        %917 = vset.pattern.permute.xlu0 0
        %918 = vperm.xlu0 %917, %v893
        %v919 = vpop.permute.xlu0 %918
        %920 = vset.pattern.permute.xlu0 0
        %921 = vperm.xlu0 %920, %v895
        %v922 = vpop.permute.xlu0 %921
        %923 = vset.pattern.permute.xlu0 0
        %924 = vperm.xlu0 %923, %v897
        %v925 = vpop.permute.xlu0 %924
        %926 = vset.pattern.permute.xlu0 0
        %927 = vperm.xlu0 %926, %v899
        %v928 = vpop.permute.xlu0 %927
        %929 = vset.pattern.permute.xlu0 0
        %930 = vperm.xlu0 %929, %v901
        %v931 = vpop.permute.xlu0 %930
        %932 = vset.pattern.permute.xlu0 0
        %933 = vperm.xlu0 %932, %v903
        %v934 = vpop.permute.xlu0 %933
        %935 = vset.pattern.permute.xlu0 0
        %936 = vperm.xlu0 %935, %v905
        %v937 = vpop.permute.xlu0 %936
        %v938 = vlaneseq
        %v939 = vshrl.u32 %v938, 7
        %v940 = vsub.s32 %v789, %v939
        %v941 = vrot.slane %v916, %v940
        %v942 = vlaneseq
        %v943 = vshrl.u32 %v942, 7
        %v944 = vsub.s32 %v789, %v943
        %v945 = vrot.slane %v919, %v944
        %v946 = vlaneseq
        %v947 = vshrl.u32 %v946, 7
        %v948 = vsub.s32 %v789, %v947
        %v949 = vrot.slane %v922, %v948
        %v950 = vlaneseq
        %v951 = vshrl.u32 %v950, 7
        %v952 = vsub.s32 %v789, %v951
        %v953 = vrot.slane %v925, %v952
        %v954 = vlaneseq
        %v955 = vshrl.u32 %v954, 7
        %v956 = vsub.s32 %v789, %v955
        %v957 = vrot.slane %v928, %v956
        %v958 = vlaneseq
        %v959 = vshrl.u32 %v958, 7
        %v960 = vsub.s32 %v789, %v959
        %v961 = vrot.slane %v931, %v960
        %v962 = vlaneseq
        %v963 = vshrl.u32 %v962, 7
        %v964 = vsub.s32 %v789, %v963
        %v965 = vrot.slane %v934, %v964
        %v966 = vlaneseq
        %v967 = vshrl.u32 %v966, 7
        %v968 = vsub.s32 %v789, %v967
        %v969 = vrot.slane %v937, %v968
        %v970 = vsel %vm822, %v945, %v941
        %v971 = vsel %vm824, %v949, %v970
        %v972 = vsel %vm826, %v953, %v971
        %v973 = vsel %vm828, %v957, %v972
        %v974 = vsel %vm830, %v961, %v973
        %v975 = vsel %vm832, %v965, %v974
        %v976 = vsel %vm834, %v969, %v975
        %v978 = vsel %vm837, %v976, 0.0
        %979 = vadd.xlane.f32.xlu0 %v978
        %v980 = vpop.xlane.xlu0 %979
        %v982 = vlaneseq
        %v983 = vshrl.u32 %v982, 7
        %v984 = vsub.s32 0, %v983
        %v985 = vrot.slane %v980, %v984
        %v986 = vlaneseq
        %v987 = vshrl.u32 %v986, 7
        %v988 = vsub.s32 1, %v987
        %v989 = vrot.slane %v980, %v988
        %v990 = vlaneseq
        %v991 = vshrl.u32 %v990, 7
        %v992 = vsub.s32 2, %v991
        %v993 = vrot.slane %v980, %v992
        %v994 = vlaneseq
        %v995 = vshrl.u32 %v994, 7
        %v996 = vsub.s32 3, %v995
        %v997 = vrot.slane %v980, %v996
        %v998 = vlaneseq
        %v999 = vshrl.u32 %v998, 7
        %v1000 = vsub.s32 4, %v999
        %v1001 = vrot.slane %v980, %v1000
        %v1002 = vlaneseq
        %v1003 = vshrl.u32 %v1002, 7
        %v1004 = vsub.s32 5, %v1003
        %v1005 = vrot.slane %v980, %v1004
        %v1006 = vlaneseq
        %v1007 = vshrl.u32 %v1006, 7
        %v1008 = vsub.s32 6, %v1007
        %v1009 = vrot.slane %v980, %v1008
        %v1010 = vlaneseq
        %v1011 = vshrl.u32 %v1010, 7
        %v1012 = vsub.s32 7, %v1011
        %v1013 = vrot.slane %v980, %v1012
        %v1022 = vrcp.pop %v985
        %v1023 = vmul.f32 %v891, %v1022
        %v1024 = vrcp.pop %v989
        %v1025 = vmul.f32 %v893, %v1024
        %v1026 = vrcp.pop %v993
        %v1027 = vmul.f32 %v895, %v1026
        %v1028 = vrcp.pop %v997
        %v1029 = vmul.f32 %v897, %v1028
        %v1030 = vrcp.pop %v1001
        %v1031 = vmul.f32 %v899, %v1030
        %v1032 = vrcp.pop %v1005
        %v1033 = vmul.f32 %v901, %v1032
        %v1034 = vrcp.pop %v1009
        %v1035 = vmul.f32 %v903, %v1034
        %v1036 = vrcp.pop %v1013
        %v1037 = vmul.f32 %v905, %v1036
        %v1038 = vadd.f32 %v1023, 1e-09
        %v1039 = vadd.f32 %v1025, 1e-09
        %v1040 = vadd.f32 %v1027, 1e-09
        %v1041 = vadd.f32 %v1029, 1e-09
        %v1042 = vadd.f32 %v1031, 1e-09
        %v1043 = vadd.f32 %v1033, 1e-09
        %v1044 = vadd.f32 %v1035, 1e-09
        %v1045 = vadd.f32 %v1037, 1e-09
        %v1046 = vld [vmem:[%s351] sm:$0xff]
        %v1047 = vld [vmem:[%s351 + $0x8] sm:$0xff]
        %v1048 = vld [vmem:[%s351 + $0x10] sm:$0xff]
        %v1049 = vld [vmem:[%s351 + $0x18] sm:$0xff]
        %v1050 = vld [vmem:[%s351 + $0x20] sm:$0xff]
        %v1051 = vld [vmem:[%s351 + $0x28] sm:$0xff]
        %v1052 = vld [vmem:[%s351 + $0x30] sm:$0xff]
        %v1053 = vld [vmem:[%s351 + $0x38] sm:$0xff]
        %1055 = vset.pattern.permute.xlu0 0
        %1056 = vperm.xlu0 %1055, %v1038
        %v1057 = vpop.permute.xlu0 %1056
        %1060 = vset.pattern.permute.xlu0 0
        %1061 = vperm.xlu0 %1060, %v1039
        %v1062 = vpop.permute.xlu0 %1061
        %1065 = vset.pattern.permute.xlu0 0
        %1066 = vperm.xlu0 %1065, %v1040
        %v1067 = vpop.permute.xlu0 %1066
        %1070 = vset.pattern.permute.xlu0 0
        %1071 = vperm.xlu0 %1070, %v1041
        %v1072 = vpop.permute.xlu0 %1071
        %1075 = vset.pattern.permute.xlu0 0
        %1076 = vperm.xlu0 %1075, %v1042
        %v1077 = vpop.permute.xlu0 %1076
        %1080 = vset.pattern.permute.xlu0 0
        %1081 = vperm.xlu0 %1080, %v1043
        %v1082 = vpop.permute.xlu0 %1081
        %1085 = vset.pattern.permute.xlu0 0
        %1086 = vperm.xlu0 %1085, %v1044
        %v1087 = vpop.permute.xlu0 %1086
        %1090 = vset.pattern.permute.xlu0 0
        %1091 = vperm.xlu0 %1090, %v1045
        %v1092 = vpop.permute.xlu0 %1091
        %v1094 = vmul.f32 %v1046, %v1057
        %v1095 = vmul.f32 %v1047, %v1062
        %v1096 = vmul.f32 %v1048, %v1067
        %v1097 = vmul.f32 %v1049, %v1072
        %v1098 = vmul.f32 %v1050, %v1077
        %v1099 = vmul.f32 %v1051, %v1082
        %v1100 = vmul.f32 %v1052, %v1087
        %v1101 = vmul.f32 %v1053, %v1092
        %v1102 = vsel %vm682, %v1094, 0.0
        %v1103 = vrot.slane %v1102, 4
        %v1104 = vadd.f32 %v1102, %v1103
        %v1105 = vrot.slane %v1104, 2
        %v1106 = vadd.f32 %v1104, %v1105
        %v1107 = vrot.slane %v1106, 1
        %v1108 = vadd.f32 %v1106, %v1107
        %v1109 = vsel %vm682, %v1095, 0.0
        %v1110 = vrot.slane %v1109, 4
        %v1111 = vadd.f32 %v1109, %v1110
        %v1112 = vrot.slane %v1111, 2
        %v1113 = vadd.f32 %v1111, %v1112
        %v1114 = vrot.slane %v1113, 1
        %v1115 = vadd.f32 %v1113, %v1114
        %v1116 = vsel %vm682, %v1096, 0.0
        %v1117 = vrot.slane %v1116, 4
        %v1118 = vadd.f32 %v1116, %v1117
        %v1119 = vrot.slane %v1118, 2
        %v1120 = vadd.f32 %v1118, %v1119
        %v1121 = vrot.slane %v1120, 1
        %v1122 = vadd.f32 %v1120, %v1121
        %v1123 = vsel %vm682, %v1097, 0.0
        %v1124 = vrot.slane %v1123, 4
        %v1125 = vadd.f32 %v1123, %v1124
        %v1126 = vrot.slane %v1125, 2
        %v1127 = vadd.f32 %v1125, %v1126
        %v1128 = vrot.slane %v1127, 1
        %v1129 = vadd.f32 %v1127, %v1128
        %v1130 = vsel %vm682, %v1098, 0.0
        %v1131 = vrot.slane %v1130, 4
        %v1132 = vadd.f32 %v1130, %v1131
        %v1133 = vrot.slane %v1132, 2
        %v1134 = vadd.f32 %v1132, %v1133
        %v1135 = vrot.slane %v1134, 1
        %v1136 = vadd.f32 %v1134, %v1135
        %v1137 = vsel %vm682, %v1099, 0.0
        %v1138 = vrot.slane %v1137, 4
        %v1139 = vadd.f32 %v1137, %v1138
        %v1140 = vrot.slane %v1139, 2
        %v1141 = vadd.f32 %v1139, %v1140
        %v1142 = vrot.slane %v1141, 1
        %v1143 = vadd.f32 %v1141, %v1142
        %v1144 = vsel %vm682, %v1100, 0.0
        %v1145 = vrot.slane %v1144, 4
        %v1146 = vadd.f32 %v1144, %v1145
        %v1147 = vrot.slane %v1146, 2
        %v1148 = vadd.f32 %v1146, %v1147
        %v1149 = vrot.slane %v1148, 1
        %v1150 = vadd.f32 %v1148, %v1149
        %v1151 = vsel %vm682, %v1101, 0.0
        %v1152 = vrot.slane %v1151, 4
        %v1153 = vadd.f32 %v1151, %v1152
        %v1154 = vrot.slane %v1153, 2
        %v1155 = vadd.f32 %v1153, %v1154
        %v1156 = vrot.slane %v1155, 1
        %v1157 = vadd.f32 %v1155, %v1156
        %v1166 = vsel %vm822, %v1115, %v1108
        %v1167 = vsel %vm824, %v1122, %v1166
        %v1168 = vsel %vm826, %v1129, %v1167
        %v1169 = vsel %vm828, %v1136, %v1168
        %v1170 = vsel %vm830, %v1143, %v1169
        %v1171 = vsel %vm832, %v1150, %v1170
        %v1172 = vsel %vm834, %v1157, %v1171
        %1174 = vst.msk [vmem:[%s399] sm:$0xff] %vm682, %v1172
        %s1175 = sand.u32 %s198, 1
        %s1176 = scalar_lea.sflag [#allocation4], %s1175
        %s1177 = sand.u32 %s198, 1
        %s1178 = smul.addr %s1177, 8
        %s1179 = scalar_lea.vmem [#allocation11], %s1178
        // Predicated region
        $region69: #{tpu_custom_call.1} parent=47 // pred_check
          %p1180 = pneg %p208
        $region70: #{tpu_custom_call.1} parent=47 // pred_check_branch
          %1182 = sbr.rel (%p1180) target = $region72
        $region71: #{tpu_custom_call.1} parent=47 // pred_region
          %s1184 = ssub.s32 128, 128
          %1185 = vsyncadd %s1176, %s1184
          %s1186 = smul.addr %s28, 128
          %s1187 = scalar_lea.hbm %s7, %s1186
          %s1189 = sshll.u32 %s1179, 4
          %s1190 = int_to_ptr.vmem [resolvable:$true] %s1189
          %1192 = dma.vmem_to_hbm [thread:$0]  %s1190, 128, %s1187, %s1176
        $region72: #{tpu_custom_call.1} parent=47 // pred_fallthru
          _
      $region48: #{tpu_custom_call.1} parent=5 // pred_fallthru
        _
      %p1193 = scmp.le.s32.totalorder 2, %s23
      // Predicated region
      $region73: #{tpu_custom_call.1} parent=5 // pred_check
        %p1194 = pneg %p1193
      $region74: #{tpu_custom_call.1} parent=5 // pred_check_branch
        %1196 = sbr.rel (%p1194) target = $region76
      $region75: #{tpu_custom_call.1} parent=5 // pred_region
        %s1197 = ssub.s32 %s23, 2
        // Predicated region
        $region77: #{tpu_custom_call.1} parent=75 // pred_check
          %p1198 = pneg %p214
        $region78: #{tpu_custom_call.1} parent=75 // pred_check_branch
          %1200 = sbr.rel (%p1198) target = $region80
        $region79: #{tpu_custom_call.1} parent=75 // pred_region
          %s1201 = sand.u32 %s199, 1
          %s1202 = scalar_lea.sflag [#allocation4], %s1201
          %s1203 = sand.u32 %s199, 1
          %s1204 = smul.addr %s1203, 8
          %s1205 = scalar_lea.vmem [#allocation11], %s1204
          %1206 = dma.done %s1202, 128
        $region80: #{tpu_custom_call.1} parent=75 // pred_fallthru
          _
      $region76: #{tpu_custom_call.1} parent=5 // pred_fallthru
        _
    $region6: #{tpu_custom_call.1} parent=1 // loop_footer
      %s27 = sadd.s32 1, %s23
    $region7: #{tpu_custom_call.1} parent=1 // loop_footer_branch
      %22 = sbr.rel target = $region3
    $region8: #{tpu_custom_call.1} parent=1 // loop_exit
      _
    %1207 = vsyncpa [#allocation3], 1
    %s1208 = scalar_lea.sflag [#allocation3], 1
    %1209 = vsyncpa %s1208, 1
    %1210 = vsyncpa [#allocation6], 1
    %s1211 = scalar_lea.sflag [#allocation6], 1
    %1212 = vsyncpa %s1211, 1
    %1213 = vsyncpa [#allocation9], 1
    %1214 = vsyncpa [#allocation4], 1
    %s1215 = scalar_lea.sflag [#allocation4], 1
    %1216 = vsyncpa %s1215, 1

</llo_original>
